<compile_context>
chip_gen: v7x
topology: tpu7x:2x2x1
jax: 0.10.0
libtpu: 0.0.40
codegen_flags: <defaults>
</compile_context>

<pallas_src>
import numpy as np
import jax
import jax.numpy as jnp
from jax.experimental import pallas as pl
from jax.experimental.pallas import tpu as pltpu

GROUPS = 8
EPS = 1e-5
K = 3  # ConvTranspose3d kernel size

_BITS = [(a, b, c) for a in (0, 1) for b in (0, 1) for c in (0, 1)]


def _kidx(pbit, sbit):
    # Output-parity bit p and input-shift bit s -> transposed-conv kernel tap.
    #   p=0: only s=0 contributes, via k=1
    #   p=1: s=0 -> k=2 ; s=1 -> k=0
    return 1 if pbit == 0 else (2 if sbit == 0 else 0)


# --------------------------- Pass 1: GroupNorm statistics --------------------
def _gn_stats_kernel(x_ref, mean_ref, rstd_ref):
    # x_ref: (G, Cg*S) -- one batch element, one group per row (lane-dense).
    x = x_ref[...].astype(jnp.float32)
    mean = jnp.mean(x, axis=1, keepdims=True)                     # (G, 1)
    var = jnp.mean((x - mean) * (x - mean), axis=1, keepdims=True)
    mean_ref[...] = mean
    rstd_ref[...] = jax.lax.rsqrt(var + EPS)


def group_norm_stats(x, n, c, s):
    g = GROUPS
    cg = c // g
    x2 = x.reshape(n * g, cg * s)                                 # free reshape
    mean, rstd = pl.pallas_call(
        _gn_stats_kernel,
        out_shape=(jax.ShapeDtypeStruct((n * g, 1), jnp.float32),
                   jax.ShapeDtypeStruct((n * g, 1), jnp.float32)),
        grid=(n,),
        in_specs=[pl.BlockSpec((g, cg * s), lambda i: (i, 0))],
        out_specs=(pl.BlockSpec((g, 1), lambda i: (i, 0)),
                   pl.BlockSpec((g, 1), lambda i: (i, 0))),
        compiler_params=pltpu.CompilerParams(
            dimension_semantics=("parallel",)),
    )(x2)
    return mean.reshape(n, g), rstd.reshape(n, g)


# ---------------- Fused GroupNorm-affine + SiLU + polyphase ConvT ------------
def spatial_up_block(x, gamma, beta, w_t, bias, *, mxu_dtype=jnp.float32,
                     co_tile=128):
    n, c, d, h, w = x.shape
    g = GROUPS
    assert c % g == 0
    s = d * h * w
    ci, co = w_t.shape[0], w_t.shape[1]
    assert ci == c
    co_tile = min(co_tile, co)
    assert co % co_tile == 0
    n_co = co // co_tile
    out_dtype = x.dtype

    # ---- Pass 1: stats, folded into a per-(n, channel) scale / shift (tiny).
    mean, rstd = group_norm_stats(x, n, c, s)                     # (n, g) each
    g_r = gamma.reshape(1, g, c // g).astype(jnp.float32)
    b_r = beta.reshape(1, g, c // g).astype(jnp.float32)
    scale = (g_r * rstd[:, :, None]).reshape(n, c, 1)
    shift = (b_r - g_r * rstd[:, :, None] * mean[:, :, None]).reshape(n, c, 1)

    # ---- One-time weight / mask re-layout (27*C*Co and 8*S elements).
    # schedule[t] = (lane_offset_of_shift_t, [(wq_slot, parity_index), ...])
    schedule = []
    w_mats = []
    for sd, sh, sw in _BITS:                                      # input shift
        off = sd * h * w + sh * w + sw
        plist = []
        for p, (pd, ph, pw) in enumerate(_BITS):                  # out parity
            if sd <= pd and sh <= ph and sw <= pw:
                kd, kh, kw = _kidx(pd, sd), _kidx(ph, sh), _kidx(pw, sw)
                plist.append((len(w_mats), p))
                w_mats.append(w_t[:, :, kd, kh, kw].T)            # (Co, C)
        schedule.append((off, plist))
    wq = jnp.stack(w_mats, 0).astype(mxu_dtype)                   # (27, Co, C)

    didx, hidx, widx = np.meshgrid(np.arange(d), np.arange(h), np.arange(w),
                                   indexing="ij")
    masks_np = np.stack(
        [((didx + sd < d) & (hidx + sh < h) & (widx + sw < w))
         .reshape(-1).astype(np.float32) for sd, sh, sw in _BITS], 0)
    masks = jnp.asarray(masks_np.reshape(8, 1, s), mxu_dtype)

    x3 = x.reshape(n, c, s)                                       # free reshape
    bias2 = bias.reshape(co, 1).astype(jnp.float32)

    def kernel(x_ref, scale_ref, shift_ref, mask_ref, w_ref, b_ref, o_ref,
               acc_ref):
        # --- GroupNorm affine (precomputed stats) + SiLU, fp32 on VPU/EUP ---
        xv = x_ref[0].astype(jnp.float32)                         # (C, S)
        y = xv * scale_ref[0] + shift_ref[0]
        y = (y * jax.nn.sigmoid(y)).astype(mxu_dtype)

        # --- accumulators start at the broadcast bias (hoisted, once) ---
        acc_ref[...] = jnp.broadcast_to(b_ref[...][None], (8, co_tile, s))

        # --- polyphase ConvT: 8 shifted views, 27 exact tap matmuls ---
        pad = jnp.zeros((c, h * w + w + 1), y.dtype)
        ypad = jnp.concatenate([y, pad], axis=1)                  # (C, S+HW+W+1)
        for t, (off, plist) in enumerate(schedule):
            yt = y if off == 0 else ypad[:, off:off + s] * mask_ref[t]
            for slot, p in plist:
                acc_ref[p] += jnp.dot(w_ref[slot], yt,
                                      preferred_element_type=jnp.float32)

        # --- lane-dense store of the 8 parity planes ---
        o_ref[0] = acc_ref[...].astype(o_ref.dtype)

    planes = pl.pallas_call(
        kernel,
        out_shape=jax.ShapeDtypeStruct((n, 8, co, s), out_dtype),
        grid=(n, n_co),
        in_specs=[
            pl.BlockSpec((1, c, s), lambda i, j: (i, 0, 0)),          # x
            pl.BlockSpec((1, c, 1), lambda i, j: (i, 0, 0)),          # scale
            pl.BlockSpec((1, c, 1), lambda i, j: (i, 0, 0)),          # shift
            pl.BlockSpec((8, 1, s), lambda i, j: (0, 0, 0)),          # masks
            pl.BlockSpec((27, co_tile, c), lambda i, j: (0, j, 0)),   # weights
            pl.BlockSpec((co_tile, 1), lambda i, j: (j, 0)),          # bias
        ],
        out_specs=pl.BlockSpec((1, 8, co_tile, s), lambda i, j: (i, 0, j, 0)),
        scratch_shapes=[pltpu.VMEM((8, co_tile, s), jnp.float32)],
        compiler_params=pltpu.CompilerParams(
            dimension_semantics=("parallel", "parallel"),
            vmem_limit_bytes=64 * 1024 * 1024),
    )(x3, scale, shift, masks, wq, bias2)

    # (N, pd, ph, pw, Co, D, H, W) -> (N, Co, D, pd, H, ph, W, pw)
    #                              -> (N, Co, 2D, 2H, 2W)
    out = planes.reshape(n, 2, 2, 2, co, d, h, w)
    out = jnp.transpose(out, (0, 4, 5, 1, 6, 2, 7, 3))
    return out.reshape(n, co, 2 * d, 2 * h, 2 * w)


# ------------------------------ Pure-JAX reference ---------------------------
def reference(x, gamma, beta, w_t, bias):
    N, C, D, H, W = x.shape
    G = GROUPS
    xr = x.reshape(N, G, (C // G) * D * H * W)
    mean = xr.mean(axis=2, keepdims=True)
    var = ((xr - mean) ** 2).mean(axis=2, keepdims=True)
    xn = ((xr - mean) / jnp.sqrt(var + EPS)).reshape(N, C, D, H, W)
    y = xn * gamma[None, :, None, None, None] + beta[None, :, None, None, None]
    y = y * jax.nn.sigmoid(y)
    w_conv = jnp.transpose(jnp.flip(w_t, axis=(2, 3, 4)), (1, 0, 2, 3, 4))
    out = jax.lax.conv_general_dilated(
        y, w_conv, window_strides=(1, 1, 1), padding=[(1, 2)] * 3,
        lhs_dilation=(2, 2, 2),
        dimension_numbers=("NCDHW", "OIDHW", "NCDHW"))
    return out + bias[None, :, None, None, None]


# ----------------------------------- main -------------------------------------
if __name__ == "__main__":
    N, C_IN, C_OUT = 2, 16, 8
    D = H = W = 4

    key = jax.random.PRNGKey(0)
    kx, kg, kb, kw_, kbi = jax.random.split(key, 5)

    x = jax.random.normal(kx, (N, C_IN, D, H, W), jnp.float32)
    gamma = 1.0 + 0.1 * jax.random.normal(kg, (C_IN,), jnp.float32)
    beta = 0.1 * jax.random.normal(kb, (C_IN,), jnp.float32)
    w_t = 0.1 * jax.random.normal(kw_, (C_IN, C_OUT, K, K, K), jnp.float32)
    bias = 0.1 * jax.random.normal(kbi, (C_OUT,), jnp.float32)

    out = jax.block_until_ready(spatial_up_block(x, gamma, beta, w_t, bias))
    assert out.shape == (N, C_OUT, 2 * D, 2 * H, 2 * W), out.shape

    ref = jax.block_until_ready(reference(x, gamma, beta, w_t, bias))
    np.testing.assert_allclose(np.asarray(out), np.asarray(ref),
                               atol=1e-4, rtol=1e-4)
    print("KERNEL_OK")
</pallas_src>

<mosaic_0001>
module attributes {stable_mosaic.version = 11 : i64} {
  func.func @_gn_stats_kernel(%arg0: i32, %arg1: memref<8x128xf32, #tpu.memory_space<vmem>>, %arg2: memref<8x1xf32, #tpu.memory_space<vmem>>, %arg3: memref<8x1xf32, #tpu.memory_space<vmem>>) attributes {dimension_semantics = [#tpu.dimension_semantics<parallel>], iteration_bounds = array<i64: 2>, scalar_prefetch = 0 : i64, scratch_operands = 0 : i64, tpu.core_type = #tpu.core_type<tc>, window_params = [{transform_indices = @transform_0, window_bounds = array<i64: 8, 128>}, {transform_indices = @transform_1, window_bounds = array<i64: 8, 1>}, {transform_indices = @transform_2, window_bounds = array<i64: 8, 1>}]} {
    %c0 = arith.constant 0 : index
    %c0_0 = arith.constant 0 : index
    %0 = vector.load %arg1[%c0, %c0_0] : memref<8x128xf32, #tpu.memory_space<vmem>>, vector<8x128xf32>
    %cst = arith.constant dense<0.000000e+00> : vector<8xf32>
    %1 = vector.multi_reduction <add>, %0, %cst [1] : vector<8x128xf32> to vector<8xf32>
    %2 = vector.shape_cast %1 : vector<8xf32> to vector<8x1xf32>
    %cst_1 = arith.constant 1.280000e+02 : f32
    %3 = vector.broadcast %cst_1 : f32 to vector<8x1xf32>
    %4 = arith.divf %2, %3 : vector<8x1xf32>
    %5 = vector.broadcast %4 : vector<8x1xf32> to vector<8x128xf32>
    %6 = arith.subf %0, %5 : vector<8x128xf32>
    %7 = vector.broadcast %4 : vector<8x1xf32> to vector<8x128xf32>
    %8 = arith.subf %0, %7 : vector<8x128xf32>
    %9 = arith.mulf %6, %8 : vector<8x128xf32>
    %cst_2 = arith.constant dense<0.000000e+00> : vector<8xf32>
    %10 = vector.multi_reduction <add>, %9, %cst_2 [1] : vector<8x128xf32> to vector<8xf32>
    %11 = vector.shape_cast %10 : vector<8xf32> to vector<8x1xf32>
    %cst_3 = arith.constant 1.280000e+02 : f32
    %12 = vector.broadcast %cst_3 : f32 to vector<8x1xf32>
    %13 = arith.divf %11, %12 : vector<8x1xf32>
    %c0_4 = arith.constant 0 : index
    %c0_5 = arith.constant 0 : index
    %14 = vector.load %arg2[%c0_4, %c0_5] : memref<8x1xf32, #tpu.memory_space<vmem>>, vector<8x1xf32>
    tpu.vector_store %arg2[%c0_4, %c0_5], %4 {strides = array<i32>} : memref<8x1xf32, #tpu.memory_space<vmem>>, vector<8x1xf32>,
    %cst_6 = arith.constant 9.99999974E-6 : f32
    %15 = vector.broadcast %cst_6 : f32 to vector<8x1xf32>
    %16 = arith.addf %13, %15 : vector<8x1xf32>
    %17 = math.rsqrt %16 : vector<8x1xf32>
    %c0_7 = arith.constant 0 : index
    %c0_8 = arith.constant 0 : index
    %18 = vector.load %arg3[%c0_7, %c0_8] : memref<8x1xf32, #tpu.memory_space<vmem>>, vector<8x1xf32>
    tpu.vector_store %arg3[%c0_7, %c0_8], %17 {strides = array<i32>} : memref<8x1xf32, #tpu.memory_space<vmem>>, vector<8x1xf32>,
    return
  }
  func.func @transform_0(%arg0: i32) -> (i32, i32) {
    %c0_i32 = arith.constant 0 : i32
    %c0_i32_0 = arith.constant 0 : i32
    return %arg0, %c0_i32 : i32, i32
  }
  func.func @transform_1(%arg0: i32) -> (i32, i32) {
    %c0_i32 = arith.constant 0 : i32
    %c0_i32_0 = arith.constant 0 : i32
    return %arg0, %c0_i32 : i32, i32
  }
  func.func @transform_2(%arg0: i32) -> (i32, i32) {
    %c0_i32 = arith.constant 0 : i32
    %c0_i32_0 = arith.constant 0 : i32
    return %arg0, %c0_i32 : i32, i32
  }
}

</mosaic_0001>

<llo_original>
// kernel: tpu_custom_call.1
$region0: #{tpu_custom_call.1}
  #allocation0 [shape = 'u32[]', space=smem, size = 0x4, offset = 0x4, fixed_abs, tag = 'smem constant byte address 0x4 - core index']
  #allocation1 [shape = 'u32[144,128]{1,0:T(1,128)}', space=vmem, size = 0x12000, scoped, tag = 'internal scratch']
  %s0 = inlined_call_operand.hbm [shape: f32[16,128], index: 0, kind: input, shape index: {}]
  %s1 = inlined_call_operand.vmem [shape: f32[16,1], index: 1, kind: output, shape index: {0}]
  %s2 = inlined_call_operand.vmem [shape: f32[16,1], index: 2, kind: output, shape index: {1}]
  %3 = xla_tuple %s1, %s2
  %s4 = sld [smem:[#allocation0]]
  $region49: #{tpu_custom_call.1} parent=0
    _
  %s6 = ssub.s32 1, %s4
  %s7 = scalar_select 0, %s6, %s4
  $region1: #{tpu_custom_call.1} parent=0
    #allocation2 [shape = 'u8[8192]{0}', space=vmem, size = 0x2000, scoped, tag = 'input window, operand 0']
    #allocation3 [shape = 's32[2]{0}', space=sflag, size = 0x8, scoped, tag = 'scoped memory for tpu_custom_call.1']
    %8 = vsyncpa [#allocation3], 0
    %s9 = scalar_lea.sflag [#allocation3], 1
    %10 = vsyncpa %s9, 0
    loop: start=0, step=1, limit=4
    $region2: #{tpu_custom_call.1} parent=1 // loop_pre_header
      _
    $region3: #{tpu_custom_call.1} parent=1 // loop_header
      %s12 = sphi 0, %s16
      %p13 = scmp.ge.s32.totalorder %s12, 4
      %s22 = sphi 0, %s24
      %s25 = sphi 0, %s22
      %s26 = sphi 0, %s25
      %s42 = sphi 0, %s26
      %s48 = sphi 0, %s50
      %s51 = sphi 0, %s48
      %s52 = sphi 0, %s51
      %s68 = sphi 0, %s52
      %s74 = sphi 0, %s76
      %s77 = sphi 0, %s74
      %s78 = sphi 0, %s77
      %s94 = sphi 0, %s78
    $region4: #{tpu_custom_call.1} parent=1 // loop_header_branch
      %15 = sbr.rel (%p13) target = $region8
    $region5: #{tpu_custom_call.1} parent=1 // loop_body
      %s17 = ssub.s32 %s12, 1
      %s18 = ssub.s32 %s12, 2
      %s19 = sadd.s32 %s12, 1
      %s20 = ssub.s32 %s12, %s19
      %p21 = scmp.eq.s32.totalorder %s20, 0
      %s23 = sadd.s32 %s22, 1
      %s24 = scalar_select %p21, %s22, %s23
      %p27 = pneg %p21
      %p28 = scmp.eq.s32.totalorder %s12, 1
      %p29 = por %p27, %p28
      %p30 = scmp.ne.s32.totalorder %s22, %s25
      %p31 = scmp.eq.s32.totalorder %s12, 0
      %p32 = por %p30, %p31
      %p33 = scmp.ne.s32.totalorder %s22, %s25
      %p34 = scmp.eq.s32.totalorder %s17, 1
      %p35 = por %p33, %p34
      %p36 = scmp.ne.s32.totalorder %s25, %s26
      %p37 = scmp.eq.s32.totalorder %s17, 0
      %p38 = por %p36, %p37
      %p39 = scmp.ne.s32.totalorder %s25, %s26
      %p40 = scmp.eq.s32.totalorder %s18, 1
      %p41 = por %p39, %p40
      %p43 = scmp.ne.s32.totalorder %s26, %s42
      %p44 = scmp.eq.s32.totalorder %s18, 0
      %p45 = por %p43, %p44
      %s46 = ssub.s32 %s12, %s19
      %p47 = scmp.eq.s32.totalorder %s46, 0
      %s49 = sadd.s32 %s48, 1
      %s50 = scalar_select %p47, %s48, %s49
      %p53 = pneg %p47
      %p54 = scmp.eq.s32.totalorder %s12, 1
      %p55 = por %p53, %p54
      %p56 = scmp.ne.s32.totalorder %s48, %s51
      %p57 = scmp.eq.s32.totalorder %s12, 0
      %p58 = por %p56, %p57
      %p59 = scmp.ne.s32.totalorder %s48, %s51
      %p60 = scmp.eq.s32.totalorder %s17, 1
      %p61 = por %p59, %p60
      %p62 = scmp.ne.s32.totalorder %s51, %s52
      %p63 = scmp.eq.s32.totalorder %s17, 0
      %p64 = por %p62, %p63
      %p65 = scmp.ne.s32.totalorder %s51, %s52
      %p66 = scmp.eq.s32.totalorder %s18, 1
      %p67 = por %p65, %p66
      %p69 = scmp.ne.s32.totalorder %s52, %s68
      %p70 = scmp.eq.s32.totalorder %s18, 0
      %p71 = por %p69, %p70
      %s72 = ssub.s32 %s12, %s19
      %p73 = scmp.eq.s32.totalorder %s72, 0
      %s75 = sadd.s32 %s74, 1
      %s76 = scalar_select %p73, %s74, %s75
      %p79 = pneg %p73
      %p80 = scmp.eq.s32.totalorder %s12, 1
      %p81 = por %p79, %p80
      %p82 = scmp.ne.s32.totalorder %s74, %s77
      %p83 = scmp.eq.s32.totalorder %s12, 0
      %p84 = por %p82, %p83
      %p85 = scmp.ne.s32.totalorder %s74, %s77
      %p86 = scmp.eq.s32.totalorder %s17, 1
      %p87 = por %p85, %p86
      %p88 = scmp.ne.s32.totalorder %s77, %s78
      %p89 = scmp.eq.s32.totalorder %s17, 0
      %p90 = por %p88, %p89
      %p91 = scmp.ne.s32.totalorder %s77, %s78
      %p92 = scmp.eq.s32.totalorder %s18, 1
      %p93 = por %p91, %p92
      %p95 = scmp.ne.s32.totalorder %s78, %s94
      %p96 = scmp.eq.s32.totalorder %s18, 0
      %p97 = por %p95, %p96
      %p98 = scmp.le.s32.totalorder 1, %s12
      %p99 = scmp.lt.s32.totalorder %s12, 3
      %p100 = pnand %p98, %p99
      %p101 = pneg %p100
      // Predicated region
      $region9: #{tpu_custom_call.1} parent=5 // pred_check
        _
      $region10: #{tpu_custom_call.1} parent=5 // pred_check_branch
        %103 = sbr.rel (%p100) target = $region12
      $region11: #{tpu_custom_call.1} parent=5 // pred_region
        %s104 = ssub.s32 %s12, 1
      $region12: #{tpu_custom_call.1} parent=5 // pred_fallthru
        _
      %p105 = scmp.lt.s32.totalorder %s12, 2
      // Predicated region
      $region13: #{tpu_custom_call.1} parent=5 // pred_check
        %p106 = pneg %p105
      $region14: #{tpu_custom_call.1} parent=5 // pred_check_branch
        %108 = sbr.rel (%p106) target = $region16
      $region15: #{tpu_custom_call.1} parent=5 // pred_region
        // Predicated region
        $region17: #{tpu_custom_call.1} parent=15 // pred_check
          %p109 = pneg %p32
        $region18: #{tpu_custom_call.1} parent=15 // pred_check_branch
          %111 = sbr.rel (%p109) target = $region20
        $region19: #{tpu_custom_call.1} parent=15 // pred_region
          %s112 = sand.u32 %s22, 1
          %s113 = scalar_lea.sflag [#allocation3], %s112
          %s114 = sand.u32 %s22, 1
          %s115 = smul.addr %s114, 8
          %s116 = scalar_lea.vmem [#allocation2], %s115
          %s118 = ssub.s32 128, 128
          %119 = vsyncadd %s113, %s118
          %s120 = smul.addr %s12, 128
          %s121 = scalar_lea.hbm %s0, %s120
          %s123 = sshll.u32 %s116, 4
          %s124 = int_to_ptr.vmem [resolvable:$true] %s123
          %126 = dma.hbm_to_vmem [thread:$0]  %s121, 128, %s124, %s113
        $region20: #{tpu_custom_call.1} parent=15 // pred_fallthru
          _
      $region16: #{tpu_custom_call.1} parent=5 // pred_fallthru
        _
      %p127 = scmp.le.s32.totalorder 1, %s12
      %p128 = scmp.lt.s32.totalorder %s12, 3
      %p129 = pnand %p127, %p128
      %p130 = pneg %p129
      // Predicated region
      $region21: #{tpu_custom_call.1} parent=5 // pred_check
        _
      $region22: #{tpu_custom_call.1} parent=5 // pred_check_branch
        %132 = sbr.rel (%p129) target = $region24
      $region23: #{tpu_custom_call.1} parent=5 // pred_region
        %s133 = ssub.s32 %s12, 1
        %s134 = sand.u32 %s25, 1
        %s135 = scalar_lea.sflag [#allocation3], %s134
        %s136 = sand.u32 %s25, 1
        %s137 = smul.addr %s136, 8
        %s138 = scalar_lea.vmem [#allocation2], %s137
        // Predicated region
        $region25: #{tpu_custom_call.1} parent=23 // pred_check
          %p139 = pneg %p38
        $region26: #{tpu_custom_call.1} parent=23 // pred_check_branch
          %141 = sbr.rel (%p139) target = $region28
        $region27: #{tpu_custom_call.1} parent=23 // pred_region
          %142 = dma.done %s135, 128
        $region28: #{tpu_custom_call.1} parent=23 // pred_fallthru
          _
        %s143 = sand.u32 %s25, 1
        %s144 = scalar_lea.sflag [#allocation3], %s143
        %s145 = sand.u32 %s25, 1
        %s146 = smul.addr %s145, 8
        %s147 = scalar_lea.vmem [#allocation2], %s146
        %p148 = pneg %p38
        %p149 = pneg %p35
        %p150 = pneg %p64
        %p151 = pneg %p61
        %p152 = scmp.lt.s32.totalorder %s17, 1
        %s153 = scalar_select %p152, %s17, 1
        %s154 = smul.addr %s153, 8
        %s155 = scalar_lea.vmem %s1, %s154
        %p156 = pneg %p90
        %p157 = pneg %p87
        %p158 = scmp.lt.s32.totalorder %s17, 1
        %s159 = scalar_select %p158, %s17, 1
        %s160 = smul.addr %s159, 8
        %s161 = scalar_lea.vmem %s2, %s160
        %p162 = scmp.lt.s32.totalorder %s17, 1
        %s163 = scalar_select %p162, %s17, 1
        %s164 = smul.addr %s163, 8
        %s165 = scalar_lea.vmem %s1, %s164
        %p166 = scmp.lt.s32.totalorder %s17, 1
        %s167 = scalar_select %p166, %s17, 1
        %s168 = smul.addr %s167, 8
        %s169 = scalar_lea.vmem %s2, %s168
        %v170 = vld [vmem:[%s138] sm:$0xff]
        %171 = vadd.xlane.f32.xlu0 %v170
        %v172 = vpop.xlane.xlu0 %171
        %v173 = vrcp.pop 128.0
        %v174 = vmul.f32 %v172, %v173
        %v175 = vsub.f32 %v170, %v174
        %v176 = vmul.f32 %v175, %v175
        %177 = vadd.xlane.f32.xlu0 %v176
        %v178 = vpop.xlane.xlu0 %177
        %v179 = vmul.f32 %v178, %v173
        %vm180 = vcmask 7168
        %181 = vst.msk [vmem:[%s165] sm:$0xff] %vm180, %v174
        %v182 = vadd.f32 %v179, 1e-05
        %v183 = vrsqrt.pop %v182
        %184 = vst.msk [vmem:[%s169] sm:$0xff] %vm180, %v183
        %p185 = scmp.lt.s32.totalorder %s17, 1
        %s186 = scalar_select %p185, %s17, 1
        %s187 = smul.addr %s186, 8
        %s188 = scalar_lea.vmem %s1, %s187
        %p189 = scmp.lt.s32.totalorder %s17, 1
        %s190 = scalar_select %p189, %s17, 1
        %s191 = smul.addr %s190, 8
        %s192 = scalar_lea.vmem %s2, %s191
        // Predicated region
        $region29: #{tpu_custom_call.1} parent=23 // pred_check
          %p193 = pneg %p61
        $region30: #{tpu_custom_call.1} parent=23 // pred_check_branch
          %195 = sbr.rel (%p193) target = $region32
        $region31: #{tpu_custom_call.1} parent=23 // pred_region
          _
        $region32: #{tpu_custom_call.1} parent=23 // pred_fallthru
          _
        // Predicated region
        $region33: #{tpu_custom_call.1} parent=23 // pred_check
          %p196 = pneg %p87
        $region34: #{tpu_custom_call.1} parent=23 // pred_check_branch
          %198 = sbr.rel (%p196) target = $region36
        $region35: #{tpu_custom_call.1} parent=23 // pred_region
          _
        $region36: #{tpu_custom_call.1} parent=23 // pred_fallthru
          _
      $region24: #{tpu_custom_call.1} parent=5 // pred_fallthru
        _
      %p199 = scmp.le.s32.totalorder 2, %s12
      // Predicated region
      $region37: #{tpu_custom_call.1} parent=5 // pred_check
        %p200 = pneg %p199
      $region38: #{tpu_custom_call.1} parent=5 // pred_check_branch
        %202 = sbr.rel (%p200) target = $region40
      $region39: #{tpu_custom_call.1} parent=5 // pred_region
        %s203 = ssub.s32 %s12, 2
        // Predicated region
        $region41: #{tpu_custom_call.1} parent=39 // pred_check
          %p204 = pneg %p67
        $region42: #{tpu_custom_call.1} parent=39 // pred_check_branch
          %206 = sbr.rel (%p204) target = $region44
        $region43: #{tpu_custom_call.1} parent=39 // pred_region
          %p207 = scmp.lt.s32.totalorder %s18, 1
          %s208 = scalar_select %p207, %s18, 1
          %s209 = smul.addr %s208, 8
          %s210 = scalar_lea.vmem %s1, %s209
        $region44: #{tpu_custom_call.1} parent=39 // pred_fallthru
          _
        // Predicated region
        $region45: #{tpu_custom_call.1} parent=39 // pred_check
          %p211 = pneg %p93
        $region46: #{tpu_custom_call.1} parent=39 // pred_check_branch
          %213 = sbr.rel (%p211) target = $region48
        $region47: #{tpu_custom_call.1} parent=39 // pred_region
          %p214 = scmp.lt.s32.totalorder %s18, 1
          %s215 = scalar_select %p214, %s18, 1
          %s216 = smul.addr %s215, 8
          %s217 = scalar_lea.vmem %s2, %s216
        $region48: #{tpu_custom_call.1} parent=39 // pred_fallthru
          _
      $region40: #{tpu_custom_call.1} parent=5 // pred_fallthru
        _
    $region6: #{tpu_custom_call.1} parent=1 // loop_footer
      %s16 = sadd.s32 1, %s12
    $region7: #{tpu_custom_call.1} parent=1 // loop_footer_branch
      %11 = sbr.rel target = $region3
    $region8: #{tpu_custom_call.1} parent=1 // loop_exit
      _
    %218 = vsyncpa [#allocation3], 1
    %s219 = scalar_lea.sflag [#allocation3], 1
    %220 = vsyncpa %s219, 1

</llo_original>
